<compile_context>
chip_gen: v7x
topology: tpu7x:2x2x1
jax: 0.10.0
libtpu: 0.0.40
codegen_flags: <defaults>
</compile_context>

<pallas_src>
import numpy as np
import jax
import jax.numpy as jnp
from jax.experimental import pallas as pl
from jax.experimental.pallas import tpu as pltpu


LANE = 128  # TPU lane width


def _round_up(v, m):
    return (v + m - 1) // m * m


# ----------------------------------------------------------------------------
# Deterministic causal-matrix construction (host-side glue).
# Mirrors the constraints enforced by SyntheticTCG.connect_graph:
#   * internal nodes form one connected component,
#   * every internal node has >= min_incoming_connections,
#   * every external node has >= num_ext_connections outgoing edges,
#   * at least one edge exists at lag 0.
# ----------------------------------------------------------------------------
def build_causal_matrix(num_internal, num_external, max_lags):
    total = num_internal + num_external
    cm = np.zeros((total, total, max_lags), dtype=bool)
    # ring over internal nodes at lag 0 (connectivity + min incoming + lag-0 edge)
    for i in range(num_internal):
        src = (i + 1) % num_internal
        cm[i, src, 0] = True
    # each external node feeds one internal node at a rotating lag
    for e in range(num_external):
        ext = num_internal + e
        tgt = e % num_internal
        lag = e % max_lags
        cm[tgt, ext, lag] = True
    return cm


# ----------------------------------------------------------------------------
# Pallas kernel body (one batch block per grid step):
#   z   = x_blk @ W_big                   (block_b, P)   MXU
#   h   = tanh(z + b1_flat)               (block_b, P)   VPU + EUP
#   out = h @ sel_w2 + b2_pad             (block_b, P)   MXU (per-node sum, w2 folded in)
# W_big stacks the mask-folded per-node first-layer weights along the lane axis;
# sel_w2 is block-diagonal with node j's column carrying w2[j, :].
# ----------------------------------------------------------------------------
def _tcg_kernel(x_ref, w1_ref, vec_ref, sel_ref, o_ref):
    z = jnp.dot(x_ref[...], w1_ref[...], preferred_element_type=jnp.float32)
    h = jnp.tanh(z + vec_ref[0:1, :])                       # + b1 (broadcast over batch)
    out = jnp.dot(h, sel_ref[...], preferred_element_type=jnp.float32)
    o_ref[...] = out + vec_ref[1:2, :]                      # + b2


def make_tcg_forward(mask_f32, w1, b1, w2, b2, batch_block=128):
    """One-time constant packing; returns (forward_batch, forward_single).

    forward_batch:  (B, n_var, max_lags) -> (B, n_var)
    forward_single: (n_var, max_lags)    -> (n_var,)   [module semantics]
    """
    mask_np = np.asarray(mask_f32, np.float32)
    w1_np = np.asarray(w1, np.float32)
    b1_np = np.asarray(b1, np.float32)
    w2_np = np.asarray(w2, np.float32)
    b2_np = np.asarray(b2, np.float32)

    N, NL = mask_np.shape
    L = NL // N
    H = w1_np.shape[-1]
    NH = N * H
    K_pad = _round_up(NL, LANE)
    P = _round_up(max(NH, N), LANE)

    # --- one-time constant packing (outside the per-call path) ---------------
    # Fold the static causal mask into W1:  (x ⊙ m_j) @ W1_j == x @ (diag(m_j) W1_j)
    w1m = mask_np[:, :, None] * w1_np                              # (N, NL, H)
    w_big_np = np.zeros((K_pad, P), np.float32)
    w_big_np[:NL, :NH] = np.transpose(w1m, (1, 0, 2)).reshape(NL, NH)

    # Merge tiny per-node bias vectors: row 0 = b1 (flattened), row 1 = b2.
    vecs_np = np.zeros((2, P), np.float32)
    vecs_np[0, :NH] = b1_np.reshape(NH)
    vecs_np[1, :N] = b2_np

    # Block-diagonal selector with w2 folded in: column j carries w2[j, :] on
    # hidden lanes j*H .. (j+1)*H-1, so h @ sel_w2 == per-node sum(h * w2).
    sel_w2_np = np.zeros((P, P), np.float32)
    w2_flat = w2_np.reshape(NH)
    for j in range(N):
        sel_w2_np[j * H:(j + 1) * H, j] = w2_flat[j * H:(j + 1) * H]

    w_big = jnp.asarray(w_big_np)
    vecs = jnp.asarray(vecs_np)
    sel_w2 = jnp.asarray(sel_w2_np)

    @jax.jit
    def forward_batch(x_batch):
        B = x_batch.shape[0]
        # Per-call work: only pad/reshape x (constants are captured, pre-packed).
        block_b = min(batch_block, _round_up(B, 8))
        B_pad = _round_up(B, block_b)
        x_flat = x_batch.reshape(B, NL).astype(jnp.float32)
        x_pad = jnp.zeros((B_pad, K_pad), jnp.float32).at[:B, :NL].set(x_flat)

        grid = (B_pad // block_b,)
        flops = 2 * B_pad * K_pad * P + 2 * B_pad * P * P
        bytes_accessed = 4 * (B_pad * K_pad + K_pad * P + 2 * P + P * P + B_pad * P)

        out = pl.pallas_call(
            _tcg_kernel,
            out_shape=jax.ShapeDtypeStruct((B_pad, P), jnp.float32),
            grid=grid,
            in_specs=[
                pl.BlockSpec((block_b, K_pad), lambda b: (b, 0)),   # x block per step
                pl.BlockSpec((K_pad, P), lambda b: (0, 0)),         # W_big (resident)
                pl.BlockSpec((2, P), lambda b: (0, 0)),             # b1/b2 (resident)
                pl.BlockSpec((P, P), lambda b: (0, 0)),             # sel_w2 (resident)
            ],
            out_specs=pl.BlockSpec((block_b, P), lambda b: (b, 0)),
            compiler_params=pltpu.CompilerParams(
                dimension_semantics=("parallel",)),
            cost_estimate=pl.CostEstimate(
                flops=flops,
                transcendentals=B_pad * P,
                bytes_accessed=bytes_accessed),
        )(x_pad, w_big, vecs, sel_w2)
        return out[:B, :N]

    def forward_single(x):
        # Module semantics: (n_var, max_lags) -> (n_var,)
        return forward_batch(x[None])[0]

    return forward_batch, forward_single


def reference_forward(x_batch, mask_f32, w1, b1, w2, b2):
    """f64 numpy reference: (B, N, L) -> (B, N)."""
    x = np.asarray(x_batch, np.float64)
    m = np.asarray(mask_f32, np.float64)
    w1n = np.asarray(w1, np.float64)
    b1n = np.asarray(b1, np.float64)
    w2n = np.asarray(w2, np.float64)
    b2n = np.asarray(b2, np.float64)
    B, N, L = x.shape
    xf = x.reshape(B, N * L)
    xm = xf[:, None, :] * m[None, :, :]                            # (B, N, NL)
    h = np.tanh(np.einsum("bnk,nkh->bnh", xm, w1n) + b1n)
    return (np.sum(h * w2n, axis=-1) + b2n).astype(np.float32)     # (B, N)


if __name__ == "__main__":
    # Module configuration (small, consistent with SyntheticTCG.__init__)
    num_internal_nodes = 6
    num_external_nodes = 2
    max_lags = 3
    hidden = 16
    total_nodes = num_internal_nodes + num_external_nodes   # n_var
    NL = total_nodes * max_lags

    # Causal matrix (bool, (total, total, max_lags)) -> per-target-node mask
    cm = build_causal_matrix(num_internal_nodes, num_external_nodes, max_lags)
    mask_f32 = jnp.asarray(cm.reshape(total_nodes, NL), dtype=jnp.float32)

    # Deterministic parameter init for the per-node functional relationships
    key = jax.random.PRNGKey(0)
    k_w1, k_b1, k_w2, k_b2, k_x1, k_xb = jax.random.split(key, 6)
    w1 = jax.random.normal(k_w1, (total_nodes, NL, hidden), jnp.float32) / np.sqrt(NL)
    b1 = jax.random.normal(k_b1, (total_nodes, hidden), jnp.float32) * 0.1
    w2 = jax.random.normal(k_w2, (total_nodes, hidden), jnp.float32) / np.sqrt(hidden)
    b2 = jax.random.normal(k_b2, (total_nodes,), jnp.float32) * 0.1

    # One-time setup: constants packed/padded and pushed to device here.
    forward_batch, forward_single = make_tcg_forward(mask_f32, w1, b1, w2, b2)

    # DEFAULT MXU precision uses a single bf16 pass for f32 inputs, so compare
    # against the f64 reference with a bf16-appropriate tolerance.
    TOL = dict(rtol=3e-2, atol=3e-2)

    # --- module-semantics single sample: (n_var, max_lags) -> (n_var,) -------
    x1 = jax.random.normal(k_x1, (total_nodes, max_lags), jnp.float32)
    out1 = jax.block_until_ready(forward_single(x1))
    assert out1.shape == (total_nodes,)
    ref1 = reference_forward(np.asarray(x1)[None], mask_f32, w1, b1, w2, b2)[0]
    np.testing.assert_allclose(np.asarray(out1), ref1, **TOL)

    # --- batched path: (B, n_var, max_lags) -> (B, n_var) --------------------
    B = 256   # grid of 2 x 128-row blocks, "parallel" over cores where present
    xb = jax.random.normal(k_xb, (B, total_nodes, max_lags), jnp.float32)
    outb = jax.block_until_ready(forward_batch(xb))
    assert outb.shape == (B, total_nodes)
    refb = reference_forward(xb, mask_f32, w1, b1, w2, b2)
    np.testing.assert_allclose(np.asarray(outb), refb, **TOL)

    print("KERNEL_OK")
</pallas_src>

<mosaic_0001>
module attributes {stable_mosaic.version = 11 : i64} {
  func.func @_tcg_kernel(%arg0: i32, %arg1: memref<8x128xf32, #tpu.memory_space<vmem>>, %arg2: memref<128x128xf32, #tpu.memory_space<vmem>>, %arg3: memref<2x128xf32, #tpu.memory_space<vmem>>, %arg4: memref<128x128xf32, #tpu.memory_space<vmem>>, %arg5: memref<8x128xf32, #tpu.memory_space<vmem>>) attributes {dimension_semantics = [#tpu.dimension_semantics<parallel>], iteration_bounds = array<i64: 1>, scalar_prefetch = 0 : i64, scratch_operands = 0 : i64, tpu.core_type = #tpu.core_type<tc>, window_params = [{transform_indices = @transform_0, window_bounds = array<i64: 8, 128>}, {pipeline_mode = #tpu.pipeline_mode<synchronous>, transform_indices = @transform_1, window_bounds = array<i64: 128, 128>}, {pipeline_mode = #tpu.pipeline_mode<synchronous>, transform_indices = @transform_2, window_bounds = array<i64: 2, 128>}, {pipeline_mode = #tpu.pipeline_mode<synchronous>, transform_indices = @transform_3, window_bounds = array<i64: 128, 128>}, {transform_indices = @transform_4, window_bounds = array<i64: 8, 128>}]} {
    %c0 = arith.constant 0 : index
    %c0_0 = arith.constant 0 : index
    %0 = vector.load %arg1[%c0, %c0_0] : memref<8x128xf32, #tpu.memory_space<vmem>>, vector<8x128xf32>
    %c0_1 = arith.constant 0 : index
    %c0_2 = arith.constant 0 : index
    %1 = vector.load %arg2[%c0_1, %c0_2] : memref<128x128xf32, #tpu.memory_space<vmem>>, vector<128x128xf32>
    %cst = arith.constant dense<0.000000e+00> : vector<8x128xf32>
    %2 = tpu.matmul %0, %1, %cst {dimension_numbers = #tpu.dot_dimension_numbers<[1], [0], [0], [1], [0, 0, 1, 1], [], []>} : vector<8x128xf32>, vector<128x128xf32>, vector<8x128xf32> -> vector<8x128xf32>
    %c0_3 = arith.constant 0 : index
    %c0_4 = arith.constant 0 : index
    %3 = vector.load %arg3[%c0_3, %c0_4] : memref<2x128xf32, #tpu.memory_space<vmem>>, vector<1x128xf32>
    %4 = vector.broadcast %3 : vector<1x128xf32> to vector<8x128xf32>
    %5 = arith.addf %2, %4 : vector<8x128xf32>
    %6 = math.tanh %5 : vector<8x128xf32>
    %c0_5 = arith.constant 0 : index
    %c0_6 = arith.constant 0 : index
    %7 = vector.load %arg4[%c0_5, %c0_6] : memref<128x128xf32, #tpu.memory_space<vmem>>, vector<128x128xf32>
    %cst_7 = arith.constant dense<0.000000e+00> : vector<8x128xf32>
    %8 = tpu.matmul %6, %7, %cst_7 {dimension_numbers = #tpu.dot_dimension_numbers<[1], [0], [0], [1], [0, 0, 1, 1], [], []>} : vector<8x128xf32>, vector<128x128xf32>, vector<8x128xf32> -> vector<8x128xf32>
    %c1 = arith.constant 1 : index
    %c0_8 = arith.constant 0 : index
    %9 = vector.load %arg3[%c1, %c0_8] : memref<2x128xf32, #tpu.memory_space<vmem>>, vector<1x128xf32>
    %10 = vector.broadcast %9 : vector<1x128xf32> to vector<8x128xf32>
    %11 = arith.addf %8, %10 : vector<8x128xf32>
    %c0_9 = arith.constant 0 : index
    %c0_10 = arith.constant 0 : index
    %12 = vector.load %arg5[%c0_9, %c0_10] : memref<8x128xf32, #tpu.memory_space<vmem>>, vector<8x128xf32>
    tpu.vector_store %arg5[%c0_9, %c0_10], %11 {strides = array<i32>} : memref<8x128xf32, #tpu.memory_space<vmem>>, vector<8x128xf32>,
    return
  }
  func.func @transform_0(%arg0: i32) -> (i32, i32) {
    %c0_i32 = arith.constant 0 : i32
    %c0_i32_0 = arith.constant 0 : i32
    return %arg0, %c0_i32 : i32, i32
  }
  func.func @transform_1(%arg0: i32) -> (i32, i32) {
    %c0_i32 = arith.constant 0 : i32
    %c0_i32_0 = arith.constant 0 : i32
    %c0_i32_1 = arith.constant 0 : i32
    return %c0_i32, %c0_i32_0 : i32, i32
  }
  func.func @transform_2(%arg0: i32) -> (i32, i32) {
    %c0_i32 = arith.constant 0 : i32
    %c0_i32_0 = arith.constant 0 : i32
    %c0_i32_1 = arith.constant 0 : i32
    return %c0_i32, %c0_i32_0 : i32, i32
  }
  func.func @transform_3(%arg0: i32) -> (i32, i32) {
    %c0_i32 = arith.constant 0 : i32
    %c0_i32_0 = arith.constant 0 : i32
    %c0_i32_1 = arith.constant 0 : i32
    return %c0_i32, %c0_i32_0 : i32, i32
  }
  func.func @transform_4(%arg0: i32) -> (i32, i32) {
    %c0_i32 = arith.constant 0 : i32
    %c0_i32_0 = arith.constant 0 : i32
    return %arg0, %c0_i32 : i32, i32
  }
}

</mosaic_0001>

<llo_original>
// kernel: forward_batch.1
$region0: #{forward_batch.1}
  #allocation0 [shape = 'u32[]', space=smem, size = 0x4, offset = 0x4, fixed_abs, tag = 'smem constant byte address 0x4 - core index']
  #allocation1 [shape = 'u32[144,128]{1,0:T(1,128)}', space=vmem, size = 0x12000, scoped, tag = 'internal scratch']
  %s0 = inlined_call_operand.vmem [shape: f32[8,128], index: 0, kind: input, shape index: {}]
  %s1 = inlined_call_operand.hbm [shape: f32[128,128], index: 1, kind: input, shape index: {}]
  %s2 = inlined_call_operand.vmem [shape: f32[2,128], index: 2, kind: input, shape index: {}]
  %s3 = inlined_call_operand.hbm [shape: f32[128,128], index: 3, kind: input, shape index: {}]
  %s4 = inlined_call_operand.vmem [shape: f32[8,128], index: 4, kind: output, shape index: {}]
  %s5 = sld [smem:[#allocation0]]
  $region34: #{forward_batch.1} parent=0
    _
  %s7 = ssub.s32 1, %s5
  %s8 = scalar_select 0, %s7, %s5
  $region1: #{forward_batch.1} parent=0
    #allocation2 [shape = 'u8[65536]{0}', space=vmem, size = 0x10000, scoped, tag = 'input window, operand 1, single buffered']
    #allocation3 [shape = 's32[1]{0}', space=sflag, size = 0x4, scoped, tag = 'scoped memory for forward_batch.1']
    #allocation4 [shape = 'u8[65536]{0}', space=vmem, size = 0x10000, scoped, tag = 'input window, operand 3, single buffered']
    #allocation5 [shape = 's32[1]{0}', space=sflag, size = 0x4, scoped, tag = 'scoped memory for forward_batch.1']
    %9 = vsyncpa [#allocation3], 0
    %10 = vsyncpa [#allocation5], 0
    // Predicated region
    $region2: #{forward_batch.1} parent=1 // pred_check
      _
    $region3: #{forward_batch.1} parent=1 // pred_check_branch
      %12 = sbr.rel (0) target = $region5
    $region4: #{forward_batch.1} parent=1 // pred_region
      _
    $region5: #{forward_batch.1} parent=1 // pred_fallthru
      _
    // Predicated region
    $region6: #{forward_batch.1} parent=1 // pred_check
      _
    $region7: #{forward_batch.1} parent=1 // pred_check_branch
      %14 = sbr.rel (0) target = $region9
    $region8: #{forward_batch.1} parent=1 // pred_region
      %s16 = ssub.s32 2048, 2048
      %17 = vsyncadd [#allocation3], %s16
      %s18 = sshll.u32 [#allocation2], 4
      %s19 = int_to_ptr.vmem [resolvable:$true] %s18
      %24 = dma.hbm_to_vmem [thread:$0]  %s1, 2048, %s19, [#allocation3], 128, 128, 8
    $region9: #{forward_batch.1} parent=1 // pred_fallthru
      _
    // Predicated region
    $region10: #{forward_batch.1} parent=1 // pred_check
      _
    $region11: #{forward_batch.1} parent=1 // pred_check_branch
      %26 = sbr.rel (0) target = $region13
    $region12: #{forward_batch.1} parent=1 // pred_region
      _
    $region13: #{forward_batch.1} parent=1 // pred_fallthru
      _
    // Predicated region
    $region14: #{forward_batch.1} parent=1 // pred_check
      _
    $region15: #{forward_batch.1} parent=1 // pred_check_branch
      %28 = sbr.rel (0) target = $region17
    $region16: #{forward_batch.1} parent=1 // pred_region
      %s30 = ssub.s32 2048, 2048
      %31 = vsyncadd [#allocation5], %s30
      %s32 = sshll.u32 [#allocation4], 4
      %s33 = int_to_ptr.vmem [resolvable:$true] %s32
      %38 = dma.hbm_to_vmem [thread:$0]  %s3, 2048, %s33, [#allocation5], 128, 128, 8
    $region17: #{forward_batch.1} parent=1 // pred_fallthru
      _
    // Predicated region
    $region18: #{forward_batch.1} parent=1 // pred_check
      _
    $region19: #{forward_batch.1} parent=1 // pred_check_branch
      %40 = sbr.rel (0) target = $region21
    $region20: #{forward_batch.1} parent=1 // pred_region
      %41 = dma.done [#allocation3], 2048
    $region21: #{forward_batch.1} parent=1 // pred_fallthru
      _
    // Predicated region
    $region22: #{forward_batch.1} parent=1 // pred_check
      _
    $region23: #{forward_batch.1} parent=1 // pred_check_branch
      %43 = sbr.rel (0) target = $region25
    $region24: #{forward_batch.1} parent=1 // pred_region
      %44 = dma.done [#allocation5], 2048
    $region25: #{forward_batch.1} parent=1 // pred_fallthru
      _
    %v45 = vld [vmem:[%s0] sm:$0xff]
    %v46 = vld [vmem:[#allocation2] sm:$0xff]
    %v47 = vld [vmem:[#allocation2 + $0x8] sm:$0xff]
    %v48 = vld [vmem:[#allocation2 + $0x10] sm:$0xff]
    %v49 = vld [vmem:[#allocation2 + $0x18] sm:$0xff]
    %v50 = vld [vmem:[#allocation2 + $0x20] sm:$0xff]
    %v51 = vld [vmem:[#allocation2 + $0x28] sm:$0xff]
    %v52 = vld [vmem:[#allocation2 + $0x30] sm:$0xff]
    %v53 = vld [vmem:[#allocation2 + $0x38] sm:$0xff]
    %v54 = vld [vmem:[#allocation2 + $0x40] sm:$0xff]
    %v55 = vld [vmem:[#allocation2 + $0x48] sm:$0xff]
    %v56 = vld [vmem:[#allocation2 + $0x50] sm:$0xff]
    %v57 = vld [vmem:[#allocation2 + $0x58] sm:$0xff]
    %v58 = vld [vmem:[#allocation2 + $0x60] sm:$0xff]
    %v59 = vld [vmem:[#allocation2 + $0x68] sm:$0xff]
    %v60 = vld [vmem:[#allocation2 + $0x70] sm:$0xff]
    %v61 = vld [vmem:[#allocation2 + $0x78] sm:$0xff]
    %v62 = vld [vmem:[%s2] sm:$0x1]
    %v63 = vlaneseq
    %v64 = vshrl.u32 %v63, 7
    %v65 = vsub.s32 0, %v64
    %v66 = vrot.slane %v62, %v65
    %67 = vmatprep.subr.mxu0 0.0
    %68 = vmatpush1.msra.mxu0 %v46
    %69 = vmatprep.subr.mxu0 0.0
    %70 = vmatpush1.msra.mxu0 %v47
    %71 = vmatprep.subr.mxu0 0.0
    %72 = vmatpush1.msra.mxu0 %v48
    %73 = vmatprep.subr.mxu0 0.0
    %74 = vmatpush1.msra.mxu0 %v49
    %75 = vmatprep.subr.mxu0 0.0
    %76 = vmatpush1.msra.mxu0 %v50
    %77 = vmatprep.subr.mxu0 0.0
    %78 = vmatpush1.msra.mxu0 %v51
    %79 = vmatprep.subr.mxu0 0.0
    %80 = vmatpush1.msra.mxu0 %v52
    %81 = vmatprep.subr.mxu0 0.0
    %82 = vmatpush1.msra.mxu0 %v53
    %83 = vmatprep.subr.mxu0 0.0
    %84 = vmatpush1.msra.mxu0 %v54
    %85 = vmatprep.subr.mxu0 0.0
    %86 = vmatpush1.msra.mxu0 %v55
    %87 = vmatprep.subr.mxu0 0.0
    %88 = vmatpush1.msra.mxu0 %v56
    %89 = vmatprep.subr.mxu0 0.0
    %90 = vmatpush1.msra.mxu0 %v57
    %91 = vmatprep.subr.mxu0 0.0
    %92 = vmatpush1.msra.mxu0 %v58
    %93 = vmatprep.subr.mxu0 0.0
    %94 = vmatpush1.msra.mxu0 %v59
    %95 = vmatprep.subr.mxu0 0.0
    %96 = vmatpush1.msra.mxu0 %v60
    %97 = vmatprep.subr.mxu0 0.0
    %98 = vmatpush1.msra.mxu0 %v61
    %99 = vmatprep.subr.mxu0 0.0
    %100 = vmatpush1.msra.mxu0 0.0
    %101 = vmatprep.subr.mxu0 0.0
    %102 = vmatpush1.msra.mxu0 0.0
    %103 = vmatprep.subr.mxu0 0.0
    %104 = vmatpush1.msra.mxu0 0.0
    %105 = vmatprep.subr.mxu0 0.0
    %106 = vmatpush1.msra.mxu0 0.0
    %107 = vmatprep.subr.mxu0 0.0
    %108 = vmatpush1.msra.mxu0 0.0
    %109 = vmatprep.subr.mxu0 0.0
    %110 = vmatpush1.msra.mxu0 0.0
    %111 = vmatprep.subr.mxu0 0.0
    %112 = vmatpush1.msra.mxu0 0.0
    %113 = vmatprep.subr.mxu0 0.0
    %114 = vmatpush1.msra.mxu0 0.0
    %115 = vmatprep.subr.mxu0 0.0
    %116 = vmatpush1.msra.mxu0 0.0
    %117 = vmatprep.subr.mxu0 0.0
    %118 = vmatpush1.msra.mxu0 0.0
    %119 = vmatprep.subr.mxu0 0.0
    %120 = vmatpush1.msra.mxu0 0.0
    %121 = vmatprep.subr.mxu0 0.0
    %122 = vmatpush1.msra.mxu0 0.0
    %123 = vmatprep.subr.mxu0 0.0
    %124 = vmatpush1.msra.mxu0 0.0
    %125 = vmatprep.subr.mxu0 0.0
    %126 = vmatpush1.msra.mxu0 0.0
    %127 = vmatprep.subr.mxu0 0.0
    %128 = vmatpush1.msra.mxu0 0.0
    %129 = vmatprep.subr.mxu0 0.0
    %130 = vmatpush1.msra.mxu0 0.0
    %131 = vmatprep.mubr.f32.mxu0 0.0
    %132 = vmatmul.mubr.f32.gmra.mrb[0].mxu0 %v45
    %v133 = vpop.f32.mrb[0].mxu0
    %v134 = vadd.f32 %v66, %v133
    %v135 = vpop.f32.mrb[0].mxu0
    %136 = vdwg.mxu0
    %v137 = vtanh.pop %v134
    %v138 = vld [vmem:[#allocation4] sm:$0xff]
    %v139 = vld [vmem:[#allocation4 + $0x8] sm:$0xff]
    %v140 = vld [vmem:[#allocation4 + $0x10] sm:$0xff]
    %v141 = vld [vmem:[#allocation4 + $0x18] sm:$0xff]
    %v142 = vld [vmem:[#allocation4 + $0x20] sm:$0xff]
    %v143 = vld [vmem:[#allocation4 + $0x28] sm:$0xff]
    %v144 = vld [vmem:[#allocation4 + $0x30] sm:$0xff]
    %v145 = vld [vmem:[#allocation4 + $0x38] sm:$0xff]
    %v146 = vld [vmem:[#allocation4 + $0x40] sm:$0xff]
    %v147 = vld [vmem:[#allocation4 + $0x48] sm:$0xff]
    %v148 = vld [vmem:[#allocation4 + $0x50] sm:$0xff]
    %v149 = vld [vmem:[#allocation4 + $0x58] sm:$0xff]
    %v150 = vld [vmem:[#allocation4 + $0x60] sm:$0xff]
    %v151 = vld [vmem:[#allocation4 + $0x68] sm:$0xff]
    %v152 = vld [vmem:[#allocation4 + $0x70] sm:$0xff]
    %v153 = vld [vmem:[#allocation4 + $0x78] sm:$0xff]
    %v154 = vld [vmem:[%s2 + $0x1] sm:$0x1]
    %v155 = vlaneseq
    %v156 = vshrl.u32 %v155, 7
    %v157 = vsub.s32 0, %v156
    %v158 = vrot.slane %v154, %v157
    %159 = vmatprep.subr.mxu0 0.0
    %160 = vmatpush1.msra.mxu0 %v138
    %161 = vmatprep.subr.mxu0 0.0
    %162 = vmatpush1.msra.mxu0 %v139
    %163 = vmatprep.subr.mxu0 0.0
    %164 = vmatpush1.msra.mxu0 %v140
    %165 = vmatprep.subr.mxu0 0.0
    %166 = vmatpush1.msra.mxu0 %v141
    %167 = vmatprep.subr.mxu0 0.0
    %168 = vmatpush1.msra.mxu0 %v142
    %169 = vmatprep.subr.mxu0 0.0
    %170 = vmatpush1.msra.mxu0 %v143
    %171 = vmatprep.subr.mxu0 0.0
    %172 = vmatpush1.msra.mxu0 %v144
    %173 = vmatprep.subr.mxu0 0.0
    %174 = vmatpush1.msra.mxu0 %v145
    %175 = vmatprep.subr.mxu0 0.0
    %176 = vmatpush1.msra.mxu0 %v146
    %177 = vmatprep.subr.mxu0 0.0
    %178 = vmatpush1.msra.mxu0 %v147
    %179 = vmatprep.subr.mxu0 0.0
    %180 = vmatpush1.msra.mxu0 %v148
    %181 = vmatprep.subr.mxu0 0.0
    %182 = vmatpush1.msra.mxu0 %v149
    %183 = vmatprep.subr.mxu0 0.0
    %184 = vmatpush1.msra.mxu0 %v150
    %185 = vmatprep.subr.mxu0 0.0
    %186 = vmatpush1.msra.mxu0 %v151
    %187 = vmatprep.subr.mxu0 0.0
    %188 = vmatpush1.msra.mxu0 %v152
    %189 = vmatprep.subr.mxu0 0.0
    %190 = vmatpush1.msra.mxu0 %v153
    %191 = vmatprep.subr.mxu0 0.0
    %192 = vmatpush1.msra.mxu0 0.0
    %193 = vmatprep.subr.mxu0 0.0
    %194 = vmatpush1.msra.mxu0 0.0
    %195 = vmatprep.subr.mxu0 0.0
    %196 = vmatpush1.msra.mxu0 0.0
    %197 = vmatprep.subr.mxu0 0.0
    %198 = vmatpush1.msra.mxu0 0.0
    %199 = vmatprep.subr.mxu0 0.0
    %200 = vmatpush1.msra.mxu0 0.0
    %201 = vmatprep.subr.mxu0 0.0
    %202 = vmatpush1.msra.mxu0 0.0
    %203 = vmatprep.subr.mxu0 0.0
    %204 = vmatpush1.msra.mxu0 0.0
    %205 = vmatprep.subr.mxu0 0.0
    %206 = vmatpush1.msra.mxu0 0.0
    %207 = vmatprep.subr.mxu0 0.0
    %208 = vmatpush1.msra.mxu0 0.0
    %209 = vmatprep.subr.mxu0 0.0
    %210 = vmatpush1.msra.mxu0 0.0
    %211 = vmatprep.subr.mxu0 0.0
    %212 = vmatpush1.msra.mxu0 0.0
    %213 = vmatprep.subr.mxu0 0.0
    %214 = vmatpush1.msra.mxu0 0.0
    %215 = vmatprep.subr.mxu0 0.0
    %216 = vmatpush1.msra.mxu0 0.0
    %217 = vmatprep.subr.mxu0 0.0
    %218 = vmatpush1.msra.mxu0 0.0
    %219 = vmatprep.subr.mxu0 0.0
    %220 = vmatpush1.msra.mxu0 0.0
    %221 = vmatprep.subr.mxu0 0.0
    %222 = vmatpush1.msra.mxu0 0.0
    %223 = vmatprep.mubr.f32.mxu0 0.0
    %224 = vmatmul.mubr.f32.gmra.mrb[0].mxu0 %v137
    %v225 = vpop.f32.mrb[0].mxu0
    %v226 = vadd.f32 %v158, %v225
    %v227 = vpop.f32.mrb[0].mxu0
    %228 = vdwg.mxu0
    %229 = vst [vmem:[%s4] sm:$0xff] %v226
    // Predicated region
    $region26: #{forward_batch.1} parent=1 // pred_check
      _
    $region27: #{forward_batch.1} parent=1 // pred_check_branch
      %231 = sbr.rel (0) target = $region29
    $region28: #{forward_batch.1} parent=1 // pred_region
      _
    $region29: #{forward_batch.1} parent=1 // pred_fallthru
      _
    // Predicated region
    $region30: #{forward_batch.1} parent=1 // pred_check
      _
    $region31: #{forward_batch.1} parent=1 // pred_check_branch
      %233 = sbr.rel (0) target = $region33
    $region32: #{forward_batch.1} parent=1 // pred_region
      _
    $region33: #{forward_batch.1} parent=1 // pred_fallthru
      _
    %234 = vsyncpa [#allocation3], 1
    %235 = vsyncpa [#allocation5], 1

</llo_original>
